<compile_context>
chip_gen: v5e
topology: v5e:2x2
jax: 0.10.0
libtpu: 0.0.40
codegen_flags: <defaults>
</compile_context>

<pallas_src>
import numpy as np
import jax
import jax.numpy as jnp
from jax.experimental import pallas as pl
from jax.experimental.pallas import tpu as pltpu


# -----------------------------------------------------------------------------
# Kernel 1: fused projection prologue.
#   a_ref <- seq_tile @ Wa^T + bias      (row-i / "repeat" projection)
#   b_ref <- seq_tile @ Wb^T             (row-j / "visible" projection)
# Done as a single MXU matmul against w_cat = [Wa^T | Wb^T]  (H, 2H).
# -----------------------------------------------------------------------------
def _proj_kernel(seq_ref, w_ref, bias_ref, a_ref, b_ref):
    h = a_ref.shape[-1]
    proj = jnp.dot(seq_ref[...], w_ref[...],
                   preferred_element_type=jnp.float32)          # (TR, 2H)
    a_ref[...] = (proj[:, :h] + bias_ref[...]).astype(a_ref.dtype)
    b_ref[...] = proj[:, h:].astype(b_ref.dtype)


# -----------------------------------------------------------------------------
# Kernel 2: pairwise tanh(A_i + B_j) over upper-triangular tile pairs.
#   a_ref : (B, TB, H)      i-tile of A      (rows it*TB .. it*TB+TB)
#   b_ref : (1, B, TB*H)    j-tile of Bm, lane-merged:  lanes c*H+h = Bm[j=jt*TB+c]
#   o_ref : (B, TB, TB*H)   lane-dense output tile; row a = local i,
#                           lane chunk c holds the pair (it*TB+a, jt*TB+c).
# No matmul here: the projections are hoisted; this is a pure VPU/EUP/store
# pipeline that the grid double-buffers against HBM.
# -----------------------------------------------------------------------------
def _pair_kernel(it_ref, jt_ref, a_ref, b_ref, o_ref):
    del it_ref, jt_ref                    # only consumed by the index_maps
    h = a_ref.shape[-1]
    n_copies = o_ref.shape[-1] // h       # == TB (j-columns folded into lanes)
    a = a_ref[...]                                        # (B, TB, H)
    b = b_ref[0]                                          # (B, TB*H)
    # Broadcast a across the j lane-chunks: lanes c*H+h <- a[..., h].
    a_wide = jnp.concatenate([a] * n_copies, axis=-1)     # (B, TB, TB*H)
    o_ref[...] = jnp.tanh(a_wide + b[:, None, :]).astype(o_ref.dtype)


def handshaking_kernel_slow_cat(seq_hiddens, W, bias, *, tb=8, proj_rows=512):
    """Pallas implementation of HandshakingKernelSlow(shaking_type='cat').

    seq_hiddens: (B, L, H)
    W          : (H, 2H)   PyTorch nn.Linear weight (out_features, in_features)
    bias       : (H,)      PyTorch nn.Linear bias
    returns    : (B, L*(L+1)//2, H)

    tb: i/j tile size (multiple of 8). tb*H >= 128 keeps stores lane-dense;
        larger tb amortizes per-grid-step overhead for long sequences.
    """
    B, L, H = seq_hiddens.shape
    assert W.shape == (H, 2 * H) and bias.shape == (H,)
    assert tb % 8 == 0
    out_dtype = seq_hiddens.dtype

    # ---- static tiling / ordering tables (trace-time numpy) -----------------
    L_pad = ((L + tb - 1) // tb) * tb
    nt = L_pad // tb
    it_list, jt_list = [], []
    slot = np.zeros((nt, nt), np.int32)           # (i_tile, j_tile) -> tile slot
    for it in range(nt):
        for jt in range(it, nt):
            slot[it, jt] = len(it_list)
            it_list.append(it)
            jt_list.append(jt)
    NT = len(it_list)                             # = nt*(nt+1)//2 tile pairs
    it_arr = jnp.asarray(np.asarray(it_list, np.int32))
    jt_arr = jnp.asarray(np.asarray(jt_list, np.int32))

    # Packed PyTorch row order r -> (i, j>=i) -> flat position in tile-packed out.
    ii = np.concatenate([np.full(L - i, i, np.int64) for i in range(L)])
    jj = np.concatenate([np.arange(i, L, dtype=np.int64) for i in range(L)])
    t_r = slot[ii // tb, jj // tb].astype(np.int64)
    flat_idx = jnp.asarray((t_r * tb + ii % tb) * tb + jj % tb, jnp.int32)

    # ---- parameters: fuse the two projection halves into one matmul ---------
    wa_t = W[:, :H].T                                          # repeat / row-i
    wb_t = W[:, H:].T                                          # visible / row-j
    w_cat = jnp.concatenate([wa_t, wb_t], axis=1).astype(jnp.float32)  # (H, 2H)
    bias2d = bias.reshape(1, H).astype(jnp.float32)

    # ---- prologue: fused projection, gridded over row tiles -----------------
    seq_pad = jnp.pad(seq_hiddens, ((0, 0), (0, L_pad - L), (0, 0)))
    R = B * L_pad
    seq2d = seq_pad.reshape(R, H)               # keep native dtype (no upcast)
    TR = min(proj_rows, R)
    a2d, b2d = pl.pallas_call(
        _proj_kernel,
        out_shape=(jax.ShapeDtypeStruct((R, H), jnp.float32),
                   jax.ShapeDtypeStruct((R, H), jnp.float32)),
        grid=(pl.cdiv(R, TR),),
        in_specs=[pl.BlockSpec((TR, H), lambda r: (r, 0)),
                  pl.BlockSpec((H, 2 * H), lambda r: (0, 0)),   # resident weights
                  pl.BlockSpec((1, H), lambda r: (0, 0))],      # resident bias
        out_specs=(pl.BlockSpec((TR, H), lambda r: (r, 0)),
                   pl.BlockSpec((TR, H), lambda r: (r, 0))),
        compiler_params=pltpu.CompilerParams(
            dimension_semantics=("parallel",)),
    )(seq2d, w_cat, bias2d)

    A = a2d.reshape(B, L_pad, H)                               # f32
    Bm = b2d.reshape(B, L_pad, H)                              # f32
    # Lane-merge the j side once in the wrapper (contiguous reshape):
    #   B_wide[jt, b, c*H + h] = Bm[b, jt*tb + c, h]
    B_wide = jnp.transpose(Bm.reshape(B, nt, tb * H), (1, 0, 2))  # (nt, B, tb*H)

    # ---- hot path: upper-triangular tile pairs only --------------------------
    o_tiles = pl.pallas_call(
        _pair_kernel,
        out_shape=jax.ShapeDtypeStruct((B, NT * tb, tb * H), out_dtype),
        grid_spec=pltpu.PrefetchScalarGridSpec(
            num_scalar_prefetch=2,
            grid=(NT,),
            in_specs=[
                pl.BlockSpec((B, tb, H), lambda t, it, jt: (0, it[t], 0)),
                pl.BlockSpec((1, B, tb * H), lambda t, it, jt: (jt[t], 0, 0)),
            ],
            out_specs=pl.BlockSpec((B, tb, tb * H), lambda t, it, jt: (0, t, 0)),
        ),
        compiler_params=pltpu.CompilerParams(
            dimension_semantics=("parallel",)),   # tile pairs are independent
    )(it_arr, jt_arr, A, B_wide)

    # ---- reorder tile-packed rows into the exact PyTorch packed order -------
    o_flat = o_tiles.reshape(B, NT * tb * tb, H)
    return jnp.take(o_flat, flat_idx, axis=1)                  # (B, L*(L+1)//2, H)


def _reference_cat(seq_hiddens, W, bias):
    """Pure-JAX mirror of the PyTorch forward (shaking_type='cat')."""
    B, L, H = seq_hiddens.shape
    segs = []
    for ind in range(L):
        hidden_each_step = seq_hiddens[:, ind, :]                     # (B, H)
        visible = seq_hiddens[:, ind:, :]                             # (B, L-ind, H)
        repeat = jnp.broadcast_to(hidden_each_step[:, None, :],
                                  (B, L - ind, H))
        cat = jnp.concatenate([repeat, visible], axis=-1)             # (B, L-ind, 2H)
        segs.append(jnp.tanh(cat @ W.T + bias))
    return jnp.concatenate(segs, axis=1)


if __name__ == "__main__":
    B, L, H = 2, 8, 32

    key = jax.random.PRNGKey(0)
    k_seq, k_w, k_b = jax.random.split(key, 3)

    seq_hiddens = jax.random.normal(k_seq, (B, L, H), dtype=jnp.float32)
    # Deterministic synthetic parameters for combine_fc: Linear(2H -> H).
    W = jax.random.normal(k_w, (H, 2 * H), dtype=jnp.float32) * 0.05
    bias = jax.random.normal(k_b, (H,), dtype=jnp.float32) * 0.05

    out = jax.jit(handshaking_kernel_slow_cat)(seq_hiddens, W, bias)
    out = jax.block_until_ready(out)

    ref = _reference_cat(seq_hiddens, W, bias)
    assert out.shape == (B, L * (L + 1) // 2, H), out.shape
    np.testing.assert_allclose(np.asarray(out), np.asarray(ref),
                               rtol=1e-5, atol=1e-5)

    print("KERNEL_OK")
</pallas_src>

<mosaic_0001>
module attributes {stable_mosaic.version = 11 : i64} {
  func.func @_proj_kernel(%arg0: i32, %arg1: memref<16x32xf32, #tpu.memory_space<vmem>>, %arg2: memref<32x64xf32, #tpu.memory_space<vmem>>, %arg3: memref<1x32xf32, #tpu.memory_space<vmem>>, %arg4: memref<16x32xf32, #tpu.memory_space<vmem>>, %arg5: memref<16x32xf32, #tpu.memory_space<vmem>>) attributes {dimension_semantics = [#tpu.dimension_semantics<parallel>], iteration_bounds = array<i64: 1>, scalar_prefetch = 0 : i64, scratch_operands = 0 : i64, tpu.core_type = #tpu.core_type<tc>, window_params = [{transform_indices = @transform_0, window_bounds = array<i64: 16, 32>}, {pipeline_mode = #tpu.pipeline_mode<synchronous>, transform_indices = @transform_1, window_bounds = array<i64: 32, 64>}, {pipeline_mode = #tpu.pipeline_mode<synchronous>, transform_indices = @transform_2, window_bounds = array<i64: 1, 32>}, {transform_indices = @transform_3, window_bounds = array<i64: 16, 32>}, {transform_indices = @transform_4, window_bounds = array<i64: 16, 32>}]} {
    %c0 = arith.constant 0 : index
    %c0_0 = arith.constant 0 : index
    %0 = vector.load %arg1[%c0, %c0_0] : memref<16x32xf32, #tpu.memory_space<vmem>>, vector<16x32xf32>
    %c0_1 = arith.constant 0 : index
    %c0_2 = arith.constant 0 : index
    %1 = vector.load %arg2[%c0_1, %c0_2] : memref<32x64xf32, #tpu.memory_space<vmem>>, vector<32x64xf32>
    %cst = arith.constant dense<0.000000e+00> : vector<16x64xf32>
    %2 = tpu.matmul %0, %1, %cst {dimension_numbers = #tpu.dot_dimension_numbers<[1], [0], [0], [1], [0, 0, 1, 1], [], []>} : vector<16x32xf32>, vector<32x64xf32>, vector<16x64xf32> -> vector<16x64xf32>
    %3 = vector.extract_strided_slice %2 {offsets = [0, 0], sizes = [16, 32], strides = [1, 1]} : vector<16x64xf32> to vector<16x32xf32>
    %c0_3 = arith.constant 0 : index
    %c0_4 = arith.constant 0 : index
    %4 = vector.load %arg3[%c0_3, %c0_4] : memref<1x32xf32, #tpu.memory_space<vmem>>, vector<1x32xf32>
    %5 = vector.broadcast %4 : vector<1x32xf32> to vector<16x32xf32>
    %6 = arith.addf %3, %5 : vector<16x32xf32>
    %c0_5 = arith.constant 0 : index
    %c0_6 = arith.constant 0 : index
    %7 = vector.load %arg4[%c0_5, %c0_6] : memref<16x32xf32, #tpu.memory_space<vmem>>, vector<16x32xf32>
    tpu.vector_store %arg4[%c0_5, %c0_6], %6 {strides = array<i32>} : memref<16x32xf32, #tpu.memory_space<vmem>>, vector<16x32xf32>,
    %8 = vector.extract_strided_slice %2 {offsets = [0, 32], sizes = [16, 32], strides = [1, 1]} : vector<16x64xf32> to vector<16x32xf32>
    %c0_7 = arith.constant 0 : index
    %c0_8 = arith.constant 0 : index
    %9 = vector.load %arg5[%c0_7, %c0_8] : memref<16x32xf32, #tpu.memory_space<vmem>>, vector<16x32xf32>
    tpu.vector_store %arg5[%c0_7, %c0_8], %8 {strides = array<i32>} : memref<16x32xf32, #tpu.memory_space<vmem>>, vector<16x32xf32>,
    return
  }
  func.func @transform_0(%arg0: i32) -> (i32, i32) {
    %c0_i32 = arith.constant 0 : i32
    %c0_i32_0 = arith.constant 0 : i32
    return %arg0, %c0_i32 : i32, i32
  }
  func.func @transform_1(%arg0: i32) -> (i32, i32) {
    %c0_i32 = arith.constant 0 : i32
    %c0_i32_0 = arith.constant 0 : i32
    %c0_i32_1 = arith.constant 0 : i32
    return %c0_i32, %c0_i32_0 : i32, i32
  }
  func.func @transform_2(%arg0: i32) -> (i32, i32) {
    %c0_i32 = arith.constant 0 : i32
    %c0_i32_0 = arith.constant 0 : i32
    %c0_i32_1 = arith.constant 0 : i32
    return %c0_i32, %c0_i32_0 : i32, i32
  }
  func.func @transform_3(%arg0: i32) -> (i32, i32) {
    %c0_i32 = arith.constant 0 : i32
    %c0_i32_0 = arith.constant 0 : i32
    return %arg0, %c0_i32 : i32, i32
  }
  func.func @transform_4(%arg0: i32) -> (i32, i32) {
    %c0_i32 = arith.constant 0 : i32
    %c0_i32_0 = arith.constant 0 : i32
    return %arg0, %c0_i32 : i32, i32
  }
}

module attributes {stable_mosaic.version = 11 : i64} {
  func.func @_pair_kernel(%arg0: i32, %arg1: memref<1xi32, #tpu.memory_space<smem>>, %arg2: memref<1xi32, #tpu.memory_space<smem>>, %arg3: memref<2x8x32xf32, #tpu.memory_space<vmem>>, %arg4: memref<1x2x256xf32, #tpu.memory_space<vmem>>, %arg5: memref<2x8x256xf32, #tpu.memory_space<vmem>>) attributes {dimension_semantics = [#tpu.dimension_semantics<parallel>], iteration_bounds = array<i64: 1>, scalar_prefetch = 2 : i64, scratch_operands = 0 : i64, tpu.core_type = #tpu.core_type<tc>, window_params = [{transform_indices = @transform_0, window_bounds = array<i64: 2, 8, 32>}, {transform_indices = @transform_1, window_bounds = array<i64: 1, 2, 256>}, {transform_indices = @transform_2, window_bounds = array<i64: 2, 8, 256>}]} {
    %c0 = arith.constant 0 : index
    %c0_0 = arith.constant 0 : index
    %c0_1 = arith.constant 0 : index
    %0 = vector.load %arg3[%c0, %c0_0, %c0_1] : memref<2x8x32xf32, #tpu.memory_space<vmem>>, vector<2x8x32xf32>
    %c0_2 = arith.constant 0 : index
    %c0_3 = arith.constant 0 : index
    %c0_4 = arith.constant 0 : index
    %1 = vector.load %arg4[%c0_2, %c0_3, %c0_4] : memref<1x2x256xf32, #tpu.memory_space<vmem>>, vector<1x2x256xf32>
    %2 = vector.shape_cast %1 : vector<1x2x256xf32> to vector<2x256xf32>
    %3 = tpu.concatenate %0, %0, %0, %0, %0, %0, %0, %0 in 2 : vector<2x8x32xf32>, vector<2x8x32xf32>, vector<2x8x32xf32>, vector<2x8x32xf32>, vector<2x8x32xf32>, vector<2x8x32xf32>, vector<2x8x32xf32>, vector<2x8x32xf32> -> vector<2x8x256xf32>
    %4 = vector.shape_cast %2 : vector<2x256xf32> to vector<2x1x256xf32>
    %5 = vector.broadcast %4 : vector<2x1x256xf32> to vector<2x8x256xf32>
    %6 = arith.addf %3, %5 : vector<2x8x256xf32>
    %7 = math.tanh %6 : vector<2x8x256xf32>
    %c0_5 = arith.constant 0 : index
    %c0_6 = arith.constant 0 : index
    %c0_7 = arith.constant 0 : index
    %8 = vector.load %arg5[%c0_5, %c0_6, %c0_7] : memref<2x8x256xf32, #tpu.memory_space<vmem>>, vector<2x8x256xf32>
    tpu.vector_store %arg5[%c0_5, %c0_6, %c0_7], %7 {strides = array<i32>} : memref<2x8x256xf32, #tpu.memory_space<vmem>>, vector<2x8x256xf32>,
    return
  }
  func.func @transform_0(%arg0: i32, %arg1: memref<1xi32, #tpu.memory_space<smem>>, %arg2: memref<1xi32, #tpu.memory_space<smem>>) -> (i32, i32, i32) {
    %0 = arith.index_cast %arg0 : i32 to index
    %1 = memref.load %arg1[%0] : memref<1xi32, #tpu.memory_space<smem>>
    %c0_i32 = arith.constant 0 : i32
    %c0_i32_0 = arith.constant 0 : i32
    %c0_i32_1 = arith.constant 0 : i32
    return %c0_i32, %1, %c0_i32_0 : i32, i32, i32
  }
  func.func @transform_1(%arg0: i32, %arg1: memref<1xi32, #tpu.memory_space<smem>>, %arg2: memref<1xi32, #tpu.memory_space<smem>>) -> (i32, i32, i32) {
    %0 = arith.index_cast %arg0 : i32 to index
    %1 = memref.load %arg2[%0] : memref<1xi32, #tpu.memory_space<smem>>
    %c0_i32 = arith.constant 0 : i32
    %c0_i32_0 = arith.constant 0 : i32
    %c0_i32_1 = arith.constant 0 : i32
    return %1, %c0_i32, %c0_i32_0 : i32, i32, i32
  }
  func.func @transform_2(%arg0: i32, %arg1: memref<1xi32, #tpu.memory_space<smem>>, %arg2: memref<1xi32, #tpu.memory_space<smem>>) -> (i32, i32, i32) {
    %c0_i32 = arith.constant 0 : i32
    %c0_i32_0 = arith.constant 0 : i32
    %c0_i32_1 = arith.constant 0 : i32
    return %c0_i32, %arg0, %c0_i32_0 : i32, i32, i32
  }
}

</mosaic_0001>

<llo_original>
// kernel: handshaking_kernel_slow_cat.3
$region0: #{handshaking_kernel_slow_cat.3}
  #allocation0 [shape = 'u32[]', space=smem, size = 0x4, offset = 0x4, fixed_abs, tag = 'smem constant byte address 0x4 - core index']
  #allocation1 [shape = 'u32[72,128]{1,0:T(1,128)}', space=vmem, size = 0x9000, scoped, tag = 'internal scratch']
  #allocation2 [shape = 's32[1]{0}', space=sflag, size = 0x4, scoped, tag = 'scoped memory for handshaking_kernel_slow_cat.3']
  #allocation3 [shape = 's32[1]{0:T(128)S(6)}', space=smem, size = 0x200, scoped, tag = 'prefetched SMEM operand 0']
  #allocation4 [shape = 's32[1]{0:T(128)S(6)}', space=smem, size = 0x200, scoped, tag = 'prefetched SMEM operand 1']
  %s0 = inlined_call_operand.<no memory space> [shape: s32[1], index: 0, kind: input, shape index: {}, may-alias: {0,1}]
  %s1 = inlined_call_operand.<no memory space> [shape: s32[1], index: 1, kind: input, shape index: {}, may-alias: {0,1}]
  %s2 = inlined_call_operand.vmem [shape: f32[2,8,32], index: 2, kind: input, shape index: {}]
  %s3 = inlined_call_operand.vmem [shape: f32[1,2,256], index: 3, kind: input, shape index: {}]
  %s4 = inlined_call_operand.vmem [shape: f32[2,8,256], index: 4, kind: output, shape index: {}]
  %s5 = sld [smem:[#allocation0]]
  $region18: #{handshaking_kernel_slow_cat.3} parent=0
    _
  %s7 = ssub.s32 1, %s5
  %s8 = scalar_select 0, %s7, %s5
  %9 = sst [smem:[#allocation3]] %s0
  %10 = sst [smem:[#allocation4]] %s1
  // Predicated region
  $region2: #{handshaking_kernel_slow_cat.3} parent=0 // pred_check
    _
  $region3: #{handshaking_kernel_slow_cat.3} parent=0 // pred_check_branch
    %12 = sbr.rel (0) target = $region5
  $region4: #{handshaking_kernel_slow_cat.3} parent=0 // pred_region
    %s13 = sld [smem:[#allocation3]]
    %p14 = scmp.lt.s32.totalorder %s13, 0
    %s15 = scalar_select %p14, %s13, 0
    %s16 = smul.addr %s15, 8
    %s17 = scalar_lea.vmem %s2, %s16
    %s18 = sld [smem:[#allocation3]]
  $region5: #{handshaking_kernel_slow_cat.3} parent=0 // pred_fallthru
    _
  // Predicated region
  $region6: #{handshaking_kernel_slow_cat.3} parent=0 // pred_check
    _
  $region7: #{handshaking_kernel_slow_cat.3} parent=0 // pred_check_branch
    %20 = sbr.rel (0) target = $region9
  $region8: #{handshaking_kernel_slow_cat.3} parent=0 // pred_region
    %s21 = sld [smem:[#allocation4]]
    %p22 = scmp.lt.s32.totalorder %s21, 0
    %s23 = scalar_select %p22, %s21, 0
    %s24 = smul.addr %s23, 2
    %s25 = smul.addr %s24, 2
    %s26 = scalar_lea.vmem %s3, %s25
    %s27 = sld [smem:[#allocation4]]
  $region9: #{handshaking_kernel_slow_cat.3} parent=0 // pred_fallthru
    _
  %s28 = sld [smem:[#allocation3]]
  %p29 = scmp.lt.s32.totalorder %s28, 0
  %s30 = scalar_select %p29, %s28, 0
  %s31 = smul.addr %s30, 8
  %s32 = scalar_lea.vmem %s2, %s31
  %s33 = sld [smem:[#allocation4]]
  %p34 = scmp.lt.s32.totalorder %s33, 0
  %s35 = scalar_select %p34, %s33, 0
  %s36 = smul.addr %s35, 2
  %s37 = smul.addr %s36, 2
  %s38 = scalar_lea.vmem %s3, %s37
  %s39 = sld [smem:[#allocation3]]
  %p40 = scmp.lt.s32.totalorder %s39, 0
  %s41 = scalar_select %p40, %s39, 0
  %s42 = smul.addr %s41, 8
  %s43 = scalar_lea.vmem %s2, %s42
  %s44 = sld [smem:[#allocation3]]
  %s45 = sld [smem:[#allocation4]]
  %p46 = scmp.lt.s32.totalorder %s45, 0
  %s47 = scalar_select %p46, %s45, 0
  %s48 = smul.addr %s47, 2
  %s49 = smul.addr %s48, 2
  %s50 = scalar_lea.vmem %s3, %s49
  %s51 = sld [smem:[#allocation4]]
  %v52 = vld [vmem:[%s43] sm:$0xff]
  %v53 = vld [vmem:[%s43 + $0x8] sm:$0xff]
  %v54 = vld [vmem:[%s50] sm:$0xf]
  %57 = vrot.lane.b32.xlu0 %v52, 32
  %v58 = vpop.permute.xlu0 %57
  %59 = vrot.lane.b32.xlu0 %v53, 32
  %v60 = vpop.permute.xlu0 %59
  %63 = vrot.lane.b32.xlu0 %v52, 64
  %v64 = vpop.permute.xlu0 %63
  %65 = vrot.lane.b32.xlu0 %v53, 64
  %v66 = vpop.permute.xlu0 %65
  %69 = vrot.lane.b32.xlu0 %v52, 96
  %v70 = vpop.permute.xlu0 %69
  %71 = vrot.lane.b32.xlu0 %v53, 96
  %v72 = vpop.permute.xlu0 %71
  %vm75 = vcmask 261120
  %v76 = vsel %vm75, %v52, %v58
  %v77 = vsel %vm75, %v53, %v60
  %vm78 = vcmask 523264
  %v79 = vsel %vm78, %v76, %v64
  %v80 = vsel %vm78, %v77, %v66
  %vm81 = vcmask 785408
  %v82 = vsel %vm81, %v79, %v70
  %v83 = vsel %vm81, %v80, %v72
  %v85 = vrot.slane %v54, 1
  %v86 = vrot.slane %v54, 2
  %v87 = vrot.slane %v54, 3
  %vm88 = vcmask 1040384
  %v89 = vsel %vm88, %v54, %v85
  %vm90 = vcmask 1042434
  %v91 = vsel %vm90, %v86, %v87
  %vm92 = vcmask 1041408
  %v93 = vsel %vm92, %v89, %v91
  %vm94 = vcmask 1041409
  %v95 = vsel %vm94, %v54, %v85
  %vm96 = vcmask 1043459
  %v97 = vsel %vm96, %v86, %v87
  %vm98 = vcmask 1042433
  %v99 = vsel %vm98, %v95, %v97
  %v100 = vrot.slane %v99, 1
  %v101 = vperm.slane %v93, 0
  %v102 = vperm.slane %v93, 1
  %v103 = vperm.slane %v100, 0
  %v104 = vperm.slane %v100, 1
  %v109 = vadd.f32 %v82, %v101
  %v110 = vadd.f32 %v82, %v102
  %v111 = vadd.f32 %v83, %v103
  %v112 = vadd.f32 %v83, %v104
  %v113 = vtanh.pop %v109
  %v114 = vtanh.pop %v110
  %v115 = vtanh.pop %v111
  %v116 = vtanh.pop %v112
  %117 = vst [vmem:[%s4] sm:$0xff] %v113
  %118 = vst [vmem:[%s4 + $0x8] sm:$0xff] %v114
  %119 = vst [vmem:[%s4 + $0x10] sm:$0xff] %v115
  %120 = vst [vmem:[%s4 + $0x18] sm:$0xff] %v116
  // Predicated region
  $region10: #{handshaking_kernel_slow_cat.3} parent=0 // pred_check
    _
  $region11: #{handshaking_kernel_slow_cat.3} parent=0 // pred_check_branch
    %122 = sbr.rel (0) target = $region13
  $region12: #{handshaking_kernel_slow_cat.3} parent=0 // pred_region
    _
  $region13: #{handshaking_kernel_slow_cat.3} parent=0 // pred_fallthru
    _
  // Predicated region
  $region14: #{handshaking_kernel_slow_cat.3} parent=0 // pred_check
    _
  $region15: #{handshaking_kernel_slow_cat.3} parent=0 // pred_check_branch
    %124 = sbr.rel (0) target = $region17
  $region16: #{handshaking_kernel_slow_cat.3} parent=0 // pred_region
    _
  $region17: #{handshaking_kernel_slow_cat.3} parent=0 // pred_fallthru
    _

// kernel: handshaking_kernel_slow_cat.2
$region0: #{handshaking_kernel_slow_cat.2}
  #allocation0 [shape = 'u32[]', space=smem, size = 0x4, offset = 0x4, fixed_abs, tag = 'smem constant byte address 0x4 - core index']
  #allocation1 [shape = 'u32[72,128]{1,0:T(1,128)}', space=vmem, size = 0x9000, scoped, tag = 'internal scratch']
  %s0 = inlined_call_operand.vmem [shape: f32[16,32], index: 0, kind: input, shape index: {}]
  %s1 = inlined_call_operand.vmem [shape: f32[32,64], index: 1, kind: input, shape index: {}]
  %s2 = inlined_call_operand.vmem [shape: f32[1,32], index: 2, kind: input, shape index: {}]
  %s3 = inlined_call_operand.vmem [shape: f32[16,32], index: 3, kind: output, shape index: {0}]
  %s4 = inlined_call_operand.vmem [shape: f32[16,32], index: 4, kind: output, shape index: {1}]
  %5 = xla_tuple %s3, %s4
  %s6 = sld [smem:[#allocation0]]
  $region30: #{handshaking_kernel_slow_cat.2} parent=0
    _
  %s8 = ssub.s32 1, %s6
  %s9 = scalar_select 0, %s8, %s6
  // Predicated region
  $region2: #{handshaking_kernel_slow_cat.2} parent=0 // pred_check
    _
  $region3: #{handshaking_kernel_slow_cat.2} parent=0 // pred_check_branch
    %11 = sbr.rel (0) target = $region5
  $region4: #{handshaking_kernel_slow_cat.2} parent=0 // pred_region
    _
  $region5: #{handshaking_kernel_slow_cat.2} parent=0 // pred_fallthru
    _
  // Predicated region
  $region6: #{handshaking_kernel_slow_cat.2} parent=0 // pred_check
    _
  $region7: #{handshaking_kernel_slow_cat.2} parent=0 // pred_check_branch
    %13 = sbr.rel (0) target = $region9
  $region8: #{handshaking_kernel_slow_cat.2} parent=0 // pred_region
    _
  $region9: #{handshaking_kernel_slow_cat.2} parent=0 // pred_fallthru
    _
  // Predicated region
  $region10: #{handshaking_kernel_slow_cat.2} parent=0 // pred_check
    _
  $region11: #{handshaking_kernel_slow_cat.2} parent=0 // pred_check_branch
    %15 = sbr.rel (0) target = $region13
  $region12: #{handshaking_kernel_slow_cat.2} parent=0 // pred_region
    _
  $region13: #{handshaking_kernel_slow_cat.2} parent=0 // pred_fallthru
    _
  %v16 = vld [vmem:[%s0] sm:$0xff]
  %v17 = vld [vmem:[%s0 + $0x8] sm:$0xff]
  %v18 = vld [vmem:[%s1] sm:$0xff]
  %v19 = vld [vmem:[%s1 + $0x8] sm:$0xff]
  %v20 = vld [vmem:[%s1 + $0x10] sm:$0xff]
  %v21 = vld [vmem:[%s1 + $0x18] sm:$0xff]
  %vm22 = vcmask 261120
  %v24 = vsel %vm22, %v16, 0
  %v27 = vsel %vm22, %v17, 0
  %29 = vmatpush.msra.mxu0 0.0
  %30 = vmatpush.msra.mxu0 0.0
  %31 = vmatpush.msra.mxu0 0.0
  %32 = vmatpush.msra.mxu0 0.0
  %33 = vmatpush.msra.mxu0 0.0
  %34 = vmatpush.msra.mxu0 0.0
  %35 = vmatpush.msra.mxu0 0.0
  %36 = vmatpush.msra.mxu0 0.0
  %37 = vmatpush.msra.mxu0 0.0
  %38 = vmatpush.msra.mxu0 0.0
  %39 = vmatpush.msra.mxu0 0.0
  %40 = vmatpush.msra.mxu0 0.0
  %41 = vmatpush.msra.mxu0 %v21
  %42 = vmatpush.msra.mxu0 %v20
  %43 = vmatpush.msra.mxu0 %v19
  %44 = vmatpush.msra.mxu0 %v18
  %45 = vmatmul.f32.gmra.mxu0 %v24
  %v46 = vpop.f32.mrf.mxu0
  %v47 = vadd.f32 0.0, %v46
  %48 = vmatmul.f32.gmra.mxu0 %v27
  %v49 = vpop.f32.mrf.mxu0
  %v50 = vadd.f32 0.0, %v49
  %51 = vdwg.mxu0
  %v52 = vld [vmem:[%s2] sm:$0x1]
  %v54 = vperm.slane %v52, 0
  %v56 = vadd.f32 %v47, %v54
  %v57 = vadd.f32 %v50, %v54
  %58 = vst.msk [vmem:[%s3] sm:$0xff] %vm22, %v56
  %59 = vst.msk [vmem:[%s3 + $0x8] sm:$0xff] %vm22, %v57
  %62 = vrot.lane.b32.xlu0 %v47, 96
  %v63 = vpop.permute.xlu0 %62
  %64 = vrot.lane.b32.xlu0 %v50, 96
  %v65 = vpop.permute.xlu0 %64
  %68 = vst.msk [vmem:[%s4] sm:$0xff] %vm22, %v63
  %69 = vst.msk [vmem:[%s4 + $0x8] sm:$0xff] %vm22, %v65
  // Predicated region
  $region14: #{handshaking_kernel_slow_cat.2} parent=0 // pred_check
    _
  $region15: #{handshaking_kernel_slow_cat.2} parent=0 // pred_check_branch
    %71 = sbr.rel (0) target = $region17
  $region16: #{handshaking_kernel_slow_cat.2} parent=0 // pred_region
    _
  $region17: #{handshaking_kernel_slow_cat.2} parent=0 // pred_fallthru
    _
  // Predicated region
  $region18: #{handshaking_kernel_slow_cat.2} parent=0 // pred_check
    _
  $region19: #{handshaking_kernel_slow_cat.2} parent=0 // pred_check_branch
    %73 = sbr.rel (0) target = $region21
  $region20: #{handshaking_kernel_slow_cat.2} parent=0 // pred_region
    _
  $region21: #{handshaking_kernel_slow_cat.2} parent=0 // pred_fallthru
    _
  // Predicated region
  $region22: #{handshaking_kernel_slow_cat.2} parent=0 // pred_check
    _
  $region23: #{handshaking_kernel_slow_cat.2} parent=0 // pred_check_branch
    %75 = sbr.rel (0) target = $region25
  $region24: #{handshaking_kernel_slow_cat.2} parent=0 // pred_region
    _
  $region25: #{handshaking_kernel_slow_cat.2} parent=0 // pred_fallthru
    _
  // Predicated region
  $region26: #{handshaking_kernel_slow_cat.2} parent=0 // pred_check
    _
  $region27: #{handshaking_kernel_slow_cat.2} parent=0 // pred_check_branch
    %77 = sbr.rel (0) target = $region29
  $region28: #{handshaking_kernel_slow_cat.2} parent=0 // pred_region
    _
  $region29: #{handshaking_kernel_slow_cat.2} parent=0 // pred_fallthru
    _

</llo_original>
